<compile_context>
chip_gen: v7x
topology: tpu7x:2x2x1
jax: 0.10.0
libtpu: 0.0.40
codegen_flags: <defaults>
</compile_context>

<pallas_src>
import jax
import jax.numpy as jnp
from jax.experimental import pallas as pl
from jax.experimental.pallas import tpu as pltpu


def _round_up(x, m):
    return (x + m - 1) // m * m


def _vmem_capacity_bytes():
    try:
        return int(pltpu.get_tpu_info().vmem_capacity_bytes)
    except Exception:
        return 64 << 20   # conservative (v7x-sized) fallback


def _linear_kernel(x_ref, w_ref, b_ref, o_ref):
    # x_ref: (tm, K) bf16 patches; w_ref: (K, tn) bf16 (pre-transposed in HBM);
    # b_ref: (1, tn) f32; o_ref: (tm, tn) out_dtype (bf16 by default).
    acc = jnp.dot(x_ref[...], w_ref[...], preferred_element_type=jnp.float32)
    o_ref[...] = (acc + b_ref[...]).astype(o_ref.dtype)


def _pick_tm(M, tm_target):
    """Pick tm so that (ideally) tm divides M -> no padded activation copy."""
    if M <= tm_target:
        return M, M                        # one block covers the full M axis
    best = 0
    for d in range(tm_target, 7, -1):      # largest divisor of M, multiple of 8
        if d % 8 == 0 and M % d == 0:
            best = d
            break
    if best >= 256:
        return best, M
    # No reasonable divisor: fall back to padding (rare for ViT shapes).
    return tm_target, _round_up(M, tm_target)


def patch_linear(x2d, weight, bias, out_dtype=jnp.bfloat16):
    """x2d: (M, K); weight: (N, K) nn.Linear layout; bias: (N,) -> (M, N)."""
    M, K = x2d.shape
    N = weight.shape[0]
    out_dtype = jnp.dtype(out_dtype)
    out_itemsize = out_dtype.itemsize

    # Lane-dense output: pad hidden_dim up to a multiple of 128.
    N_pad = _round_up(max(N, 128), 128)
    if N_pad != N:
        weight = jnp.pad(weight, ((0, N_pad - N), (0, 0)))
        bias = jnp.pad(bias, (0, N_pad - N))
    bias2d = bias.reshape(1, N_pad).astype(jnp.float32)

    # bf16 feeds for the MXU (f32 accumulation inside the kernel). Weight is
    # transposed once in HBM to (K, N_pad) -> canonical contraction, no in-kernel
    # transpose of a tile whose data never changes.
    x_bf16 = x2d.astype(jnp.bfloat16)
    w_t = jnp.transpose(weight).astype(jnp.bfloat16)          # (K, N_pad)

    # Tile sizes. Bigger tm = fewer grid steps / bigger DMAs; footprint stays
    # far under VMEM on all generations (checked below via vmem_limit).
    tm_target = 2048 if K <= 1024 else 1024
    tm, M_pad = _pick_tm(M, tm_target)

    # Keep the whole weight resident as a single block whenever it fits
    # comfortably in VMEM (constant block index -> fetched from HBM once).
    if K * N_pad * 2 <= (16 << 20):
        tn = N_pad
    else:
        tn = next(c for c in (1024, 512, 256, 128) if N_pad % c == 0)

    if M_pad != M:
        x_bf16 = jnp.pad(x_bf16, ((0, M_pad - M), (0, 0)))

    grid = (M_pad // tm, N_pad // tn)

    # Double-buffered VMEM footprint of one grid step (+ headroom), clamped to
    # the physical capacity of this generation.
    vmem = _vmem_capacity_bytes()
    step_bytes = tm * K * 2 + K * tn * 2 + tn * 4 + tm * tn * out_itemsize
    vmem_limit = int(min(max(2 * 2 * step_bytes, 4 << 20), vmem - (8 << 20)))

    cost = pl.CostEstimate(
        flops=2 * M_pad * K * N_pad,
        transcendentals=0,
        bytes_accessed=2 * M_pad * K + 2 * K * N_pad + 4 * N_pad
                       + out_itemsize * M_pad * N_pad,
    )

    out = pl.pallas_call(
        _linear_kernel,
        out_shape=jax.ShapeDtypeStruct((M_pad, N_pad), out_dtype),
        grid_spec=pltpu.PrefetchScalarGridSpec(
            num_scalar_prefetch=0,
            grid=grid,
            in_specs=[
                pl.BlockSpec((tm, K), lambda i, j: (i, 0)),
                pl.BlockSpec((K, tn), lambda i, j: (0, j)),   # resident when tn==N_pad
                pl.BlockSpec((1, tn), lambda i, j: (0, j)),
            ],
            out_specs=pl.BlockSpec((tm, tn), lambda i, j: (i, j)),
        ),
        compiler_params=pltpu.CompilerParams(
            # K fully inside the block -> no reduction axis; both axes independent.
            dimension_semantics=("parallel", "parallel"),
            vmem_limit_bytes=vmem_limit,
        ),
        cost_estimate=cost,
    )(x_bf16, w_t, bias2d)

    if M_pad != M or N_pad != N:
        out = out[:M, :N]
    return out


def patch_embedding(img, weight, bias, patch_height, patch_width,
                    out_dtype=jnp.bfloat16):
    """Forward pass of PatchEmbedding.

    img:    (B, C, H, W)  NCHW, H % patch_height == 0, W % patch_width == 0
    weight: (hidden_dim, patch_dim)   PyTorch nn.Linear layout (not transposed)
    bias:   (hidden_dim,)
    returns (B, num_patches, hidden_dim) in out_dtype (bf16 by default; pass
            jnp.float32 for an f32 result matching PyTorch's output dtype).
    """
    B, C, H, W = img.shape
    p1, p2 = patch_height, patch_width
    h, w = H // p1, W // p2
    patch_dim = p1 * p2 * C
    hidden_dim = weight.shape[0]

    # Cast to bf16 BEFORE the patchify transpose: halves the HBM round-trip of
    # the rearranged intermediate. Rearrange 'b c (h p1) (w p2) -> b (h w) (p1 p2 c)'.
    x = img.astype(jnp.bfloat16)
    x = x.reshape(B, C, h, p1, w, p2)
    x = jnp.transpose(x, (0, 2, 4, 3, 5, 1))          # (B, h, w, p1, p2, C)
    patches = x.reshape(B * h * w, patch_dim)         # (B*hw, p1*p2*C)

    out = patch_linear(patches, weight, bias, out_dtype=out_dtype)
    return out.reshape(B, h * w, hidden_dim)


if __name__ == "__main__":
    # Small shapes: batch=2, channels=3, 16x16 image, 8x8 patches -> 4 patches,
    # patch_dim = 8*8*3 = 192, hidden_dim = 32.
    B, C, H, W = 2, 3, 16, 16
    p1 = p2 = 8
    patch_dim = p1 * p2 * C
    hidden_dim = 32

    key = jax.random.PRNGKey(0)
    k_img, k_w, k_b = jax.random.split(key, 3)

    img = jax.random.normal(k_img, (B, C, H, W), dtype=jnp.float32)
    # Deterministic nn.Linear-style init: U(-1/sqrt(fan_in), 1/sqrt(fan_in))
    bound = 1.0 / (patch_dim ** 0.5)
    weight = jax.random.uniform(k_w, (hidden_dim, patch_dim),
                                minval=-bound, maxval=bound, dtype=jnp.float32)
    bias = jax.random.uniform(k_b, (hidden_dim,),
                              minval=-bound, maxval=bound, dtype=jnp.float32)

    out = patch_embedding(img, weight, bias, p1, p2)
    out = jax.block_until_ready(out)

    # Reference (pure JAX), with the same bf16 input quantization the kernel uses.
    x_ref = img.reshape(B, C, H // p1, p1, W // p2, p2)
    x_ref = jnp.transpose(x_ref, (0, 2, 4, 3, 5, 1)).reshape(B, -1, patch_dim)
    x_q = x_ref.astype(jnp.bfloat16).astype(jnp.float32)
    w_q = weight.astype(jnp.bfloat16).astype(jnp.float32)
    ref = x_q @ w_q.T + bias

    assert out.shape == (B, (H // p1) * (W // p2), hidden_dim)
    assert out.dtype == jnp.bfloat16
    assert jnp.allclose(out.astype(jnp.float32), ref, atol=2e-2, rtol=2e-2)

    print("KERNEL_OK")
</pallas_src>

<mosaic_0001>
module attributes {stable_mosaic.version = 11 : i64} {
  func.func @_linear_kernel(%arg0: i32, %arg1: i32, %arg2: memref<8x192xbf16, #tpu.memory_space<vmem>>, %arg3: memref<192x128xbf16, #tpu.memory_space<vmem>>, %arg4: memref<1x128xf32, #tpu.memory_space<vmem>>, %arg5: memref<8x128xbf16, #tpu.memory_space<vmem>>) attributes {dimension_semantics = [#tpu.dimension_semantics<parallel>, #tpu.dimension_semantics<parallel>], iteration_bounds = array<i64: 1, 1>, scalar_prefetch = 0 : i64, scratch_operands = 0 : i64, tpu.core_type = #tpu.core_type<tc>, window_params = [{transform_indices = @transform_0, window_bounds = array<i64: 8, 192>}, {transform_indices = @transform_1, window_bounds = array<i64: 192, 128>}, {transform_indices = @transform_2, window_bounds = array<i64: 1, 128>}, {transform_indices = @transform_3, window_bounds = array<i64: 8, 128>}]} {
    %c0 = arith.constant 0 : index
    %c0_0 = arith.constant 0 : index
    %0 = vector.load %arg2[%c0, %c0_0] : memref<8x192xbf16, #tpu.memory_space<vmem>>, vector<8x192xbf16>
    %c0_1 = arith.constant 0 : index
    %c0_2 = arith.constant 0 : index
    %1 = vector.load %arg3[%c0_1, %c0_2] : memref<192x128xbf16, #tpu.memory_space<vmem>>, vector<192x128xbf16>
    %cst = arith.constant dense<0.000000e+00> : vector<8x128xf32>
    %2 = tpu.matmul %0, %1, %cst {dimension_numbers = #tpu.dot_dimension_numbers<[1], [0], [0], [1], [0, 0, 1, 1], [], []>} : vector<8x192xbf16>, vector<192x128xbf16>, vector<8x128xf32> -> vector<8x128xf32>
    %c0_3 = arith.constant 0 : index
    %c0_4 = arith.constant 0 : index
    %3 = vector.load %arg4[%c0_3, %c0_4] : memref<1x128xf32, #tpu.memory_space<vmem>>, vector<1x128xf32>
    %4 = vector.broadcast %3 : vector<1x128xf32> to vector<8x128xf32>
    %5 = arith.addf %2, %4 : vector<8x128xf32>
    %6 = arith.truncf %5 : vector<8x128xf32> to vector<8x128xbf16>
    %c0_5 = arith.constant 0 : index
    %c0_6 = arith.constant 0 : index
    %7 = vector.load %arg5[%c0_5, %c0_6] : memref<8x128xbf16, #tpu.memory_space<vmem>>, vector<8x128xbf16>
    tpu.vector_store %arg5[%c0_5, %c0_6], %6 {strides = array<i32>} : memref<8x128xbf16, #tpu.memory_space<vmem>>, vector<8x128xbf16>,
    return
  }
  func.func @transform_0(%arg0: i32, %arg1: i32) -> (i32, i32) {
    %c0_i32 = arith.constant 0 : i32
    %c0_i32_0 = arith.constant 0 : i32
    return %arg0, %c0_i32 : i32, i32
  }
  func.func @transform_1(%arg0: i32, %arg1: i32) -> (i32, i32) {
    %c0_i32 = arith.constant 0 : i32
    %c0_i32_0 = arith.constant 0 : i32
    return %c0_i32, %arg1 : i32, i32
  }
  func.func @transform_2(%arg0: i32, %arg1: i32) -> (i32, i32) {
    %c0_i32 = arith.constant 0 : i32
    %c0_i32_0 = arith.constant 0 : i32
    return %c0_i32, %arg1 : i32, i32
  }
  func.func @transform_3(%arg0: i32, %arg1: i32) -> (i32, i32) {
    %c0_i32 = arith.constant 0 : i32
    return %arg0, %arg1 : i32, i32
  }
}

</mosaic_0001>

<llo_original>
// kernel: tpu_custom_call.1
$region0: #{tpu_custom_call.1}
  #allocation0 [shape = 'u32[]', space=smem, size = 0x4, offset = 0x4, fixed_abs, tag = 'smem constant byte address 0x4 - core index']
  #allocation1 [shape = 'u32[144,128]{1,0:T(1,128)}', space=vmem, size = 0x12000, scoped, tag = 'internal scratch']
  %s0 = inlined_call_operand.hbm [shape: bf16[8,192], index: 0, kind: input, shape index: {}]
  %s1 = inlined_call_operand.hbm [shape: bf16[192,128], index: 1, kind: input, shape index: {}]
  %s2 = inlined_call_operand.vmem [shape: f32[1,128], index: 2, kind: input, shape index: {}]
  %s3 = inlined_call_operand.hbm [shape: bf16[8,128], index: 3, kind: output, shape index: {}]
  %s4 = sld [smem:[#allocation0]]
  $region30: #{tpu_custom_call.1} parent=0
    _
  %s6 = ssub.s32 1, %s4
  %s7 = scalar_select 0, %s6, %s4
  $region1: #{tpu_custom_call.1} parent=0
    #allocation2 [shape = 'u8[4096]{0}', space=vmem, size = 0x1000, scoped, tag = 'input window, operand 0, single buffered']
    #allocation3 [shape = 's32[1]{0}', space=sflag, size = 0x4, scoped, tag = 'scoped memory for tpu_custom_call.1']
    #allocation4 [shape = 's32[1]{0}', space=sflag, size = 0x4, scoped, tag = 'scoped memory for tpu_custom_call.1']
    #allocation5 [shape = 'u8[49152]{0}', space=vmem, size = 0xc000, scoped, tag = 'input window, operand 1, single buffered']
    #allocation6 [shape = 's32[1]{0}', space=sflag, size = 0x4, scoped, tag = 'scoped memory for tpu_custom_call.1']
    #allocation7 [shape = 'u8[2048]{0}', space=vmem, size = 0x800, scoped, tag = 'output window, operand 0, single buffered']
    %8 = vsyncpa [#allocation3], 0
    %9 = vsyncpa [#allocation6], 0
    %10 = vsyncpa [#allocation4], 0
    // Predicated region
    $region2: #{tpu_custom_call.1} parent=1 // pred_check
      _
    $region3: #{tpu_custom_call.1} parent=1 // pred_check_branch
      %12 = sbr.rel (0) target = $region5
    $region4: #{tpu_custom_call.1} parent=1 // pred_region
      %s14 = ssub.s32 128, 128
      %15 = vsyncadd [#allocation3], %s14
      %s17 = sshll.u32 [#allocation2], 4
      %s18 = int_to_ptr.vmem [resolvable:$true] %s17
      %20 = dma.hbm_to_vmem [thread:$0]  %s0, 128, %s18, [#allocation3]
    $region5: #{tpu_custom_call.1} parent=1 // pred_fallthru
      _
    // Predicated region
    $region6: #{tpu_custom_call.1} parent=1 // pred_check
      _
    $region7: #{tpu_custom_call.1} parent=1 // pred_check_branch
      %22 = sbr.rel (0) target = $region9
    $region8: #{tpu_custom_call.1} parent=1 // pred_region
      %s24 = ssub.s32 1536, 1536
      %25 = vsyncadd [#allocation6], %s24
      %s26 = sshll.u32 [#allocation5], 4
      %s27 = int_to_ptr.vmem [resolvable:$true] %s26
      %32 = dma.hbm_to_vmem [thread:$0]  %s1, 1536, %s27, [#allocation6], 64, 64, 4
    $region9: #{tpu_custom_call.1} parent=1 // pred_fallthru
      _
    // Predicated region
    $region10: #{tpu_custom_call.1} parent=1 // pred_check
      _
    $region11: #{tpu_custom_call.1} parent=1 // pred_check_branch
      %34 = sbr.rel (0) target = $region13
    $region12: #{tpu_custom_call.1} parent=1 // pred_region
      _
    $region13: #{tpu_custom_call.1} parent=1 // pred_fallthru
      _
    // Predicated region
    $region14: #{tpu_custom_call.1} parent=1 // pred_check
      _
    $region15: #{tpu_custom_call.1} parent=1 // pred_check_branch
      %36 = sbr.rel (0) target = $region17
    $region16: #{tpu_custom_call.1} parent=1 // pred_region
      %37 = dma.done [#allocation3], 128
    $region17: #{tpu_custom_call.1} parent=1 // pred_fallthru
      _
    // Predicated region
    $region18: #{tpu_custom_call.1} parent=1 // pred_check
      _
    $region19: #{tpu_custom_call.1} parent=1 // pred_check_branch
      %39 = sbr.rel (0) target = $region21
    $region20: #{tpu_custom_call.1} parent=1 // pred_region
      %40 = dma.done [#allocation6], 1536
    $region21: #{tpu_custom_call.1} parent=1 // pred_fallthru
      _
    %v42 = vld [vmem:[#allocation2] sm:$0xff]
    %v43 = vld [vmem:[#allocation5] sm:$0xf]
    %v44 = vld [vmem:[#allocation5 + $0x4] sm:$0xf]
    %v45 = vld [vmem:[#allocation5 + $0x8] sm:$0xf]
    %v46 = vld [vmem:[#allocation5 + $0xc] sm:$0xf]
    %v47 = vld [vmem:[#allocation5 + $0x10] sm:$0xf]
    %v48 = vld [vmem:[#allocation5 + $0x14] sm:$0xf]
    %v49 = vld [vmem:[#allocation5 + $0x18] sm:$0xf]
    %v50 = vld [vmem:[#allocation5 + $0x1c] sm:$0xf]
    %v51 = vld [vmem:[#allocation5 + $0x20] sm:$0xf]
    %v52 = vld [vmem:[#allocation5 + $0x24] sm:$0xf]
    %v53 = vld [vmem:[#allocation5 + $0x28] sm:$0xf]
    %v54 = vld [vmem:[#allocation5 + $0x2c] sm:$0xf]
    %v55 = vld [vmem:[#allocation5 + $0x30] sm:$0xf]
    %v56 = vld [vmem:[#allocation5 + $0x34] sm:$0xf]
    %v57 = vld [vmem:[#allocation5 + $0x38] sm:$0xf]
    %v58 = vld [vmem:[#allocation5 + $0x3c] sm:$0xf]
    %v59 = vld [vmem:[#allocation5 + $0x40] sm:$0xf]
    %v60 = vld [vmem:[#allocation5 + $0x44] sm:$0xf]
    %v61 = vld [vmem:[#allocation5 + $0x48] sm:$0xf]
    %v62 = vld [vmem:[#allocation5 + $0x4c] sm:$0xf]
    %v63 = vld [vmem:[#allocation5 + $0x50] sm:$0xf]
    %v64 = vld [vmem:[#allocation5 + $0x54] sm:$0xf]
    %v65 = vld [vmem:[#allocation5 + $0x58] sm:$0xf]
    %v66 = vld [vmem:[#allocation5 + $0x5c] sm:$0xf]
    %v67 = vld [vmem:[%s2] sm:$0x1]
    %v69 = vlaneseq
    %v70 = vshrl.u32 %v69, 7
    %v71 = vsub.s32 0, %v70
    %v72 = vrot.slane %v67, %v71
    %v75 = vunpack.c.l.b16 %v42
    %v76 = vunpack.c.h.b16 %v42
    %v77 = vpack.c.b16 %v75, %v75
    %v78 = vpack.c.b16 %v76, %v76
    %v104 = vunpack.c.l.b16 %v43
    %v105 = vunpack.c.l.b16 %v44
    %v106 = vunpack.c.l.b16 %v45
    %v107 = vunpack.c.l.b16 %v46
    %v108 = vunpack.c.l.b16 %v47
    %v109 = vunpack.c.l.b16 %v48
    %v110 = vunpack.c.l.b16 %v49
    %v111 = vunpack.c.l.b16 %v50
    %v112 = vunpack.c.l.b16 %v51
    %v113 = vunpack.c.l.b16 %v52
    %v114 = vunpack.c.l.b16 %v53
    %v115 = vunpack.c.l.b16 %v54
    %v116 = vunpack.c.l.b16 %v55
    %v117 = vunpack.c.l.b16 %v56
    %v118 = vunpack.c.l.b16 %v57
    %v119 = vunpack.c.l.b16 %v58
    %v120 = vunpack.c.l.b16 %v59
    %v121 = vunpack.c.l.b16 %v60
    %v122 = vunpack.c.l.b16 %v61
    %v123 = vunpack.c.l.b16 %v62
    %v124 = vunpack.c.l.b16 %v63
    %v125 = vunpack.c.l.b16 %v64
    %v126 = vunpack.c.l.b16 %v65
    %v127 = vunpack.c.l.b16 %v66
    %v128 = vpack.c.b16 %v105, %v104
    %v129 = vpack.c.b16 %v107, %v106
    %v130 = vpack.c.b16 %v109, %v108
    %v131 = vpack.c.b16 %v111, %v110
    %v132 = vpack.c.b16 %v113, %v112
    %v133 = vpack.c.b16 %v115, %v114
    %v134 = vpack.c.b16 %v117, %v116
    %v135 = vpack.c.b16 %v119, %v118
    %v136 = vpack.c.b16 %v121, %v120
    %v137 = vpack.c.b16 %v123, %v122
    %v138 = vpack.c.b16 %v125, %v124
    %v139 = vpack.c.b16 %v127, %v126
    %vm152 = vcmask 523264
    %v154 = vsel %vm152, %v78, 0
    %156 = vmatprep.subr.bf16.mxu0 0
    %157 = vmatpush1.bf16.msra.mxu0 %v128
    %158 = vmatprep.subr.bf16.mxu0 0
    %159 = vmatpush1.bf16.msra.mxu0 %v129
    %160 = vmatprep.subr.bf16.mxu0 0
    %161 = vmatpush1.bf16.msra.mxu0 %v130
    %162 = vmatprep.subr.bf16.mxu0 0
    %163 = vmatpush1.bf16.msra.mxu0 %v131
    %164 = vmatprep.subr.bf16.mxu0 0
    %165 = vmatpush1.bf16.msra.mxu0 %v132
    %166 = vmatprep.subr.bf16.mxu0 0
    %167 = vmatpush1.bf16.msra.mxu0 %v133
    %168 = vmatprep.subr.bf16.mxu0 0
    %169 = vmatpush1.bf16.msra.mxu0 %v134
    %170 = vmatprep.subr.bf16.mxu0 0
    %171 = vmatpush1.bf16.msra.mxu0 %v135
    %172 = vmatprep.subr.bf16.mxu0 0
    %173 = vmatpush1.bf16.msra.mxu0 %v136
    %174 = vmatprep.subr.bf16.mxu0 0
    %175 = vmatpush1.bf16.msra.mxu0 %v137
    %176 = vmatprep.subr.bf16.mxu0 0
    %177 = vmatpush1.bf16.msra.mxu0 %v138
    %178 = vmatprep.subr.bf16.mxu0 0
    %179 = vmatpush1.bf16.msra.mxu0 %v139
    %180 = vmatprep.subr.bf16.mxu0 0
    %181 = vmatpush1.bf16.msra.mxu0 0
    %182 = vmatprep.subr.bf16.mxu0 0
    %183 = vmatpush1.bf16.msra.mxu0 0
    %184 = vmatprep.subr.bf16.mxu0 0
    %185 = vmatpush1.bf16.msra.mxu0 0
    %186 = vmatprep.subr.bf16.mxu0 0
    %187 = vmatpush1.bf16.msra.mxu0 0
    %188 = vmatprep.mubr.bf16.mxu0 %v154
    %189 = vmatmul.mubr.bf16.gmra.mrb[0].mxu0 %v77
    %v190 = vpop.f32.mrb[0].mxu0
    %v191 = vadd.f32 %v72, %v190
    %v192 = vpop.f32.mrb[0].mxu0
    %v193 = vpop.f32.mrb[0].mxu0
    %v194 = vpop.f32.mrb[0].mxu0
    %195 = vdwg.mxu0
    %v196 = vpack.c.bf16 %v191, %v191
    %197 = vst [vmem:[#allocation7] sm:$0xf] %v196
    // Predicated region
    $region22: #{tpu_custom_call.1} parent=1 // pred_check
      _
    $region23: #{tpu_custom_call.1} parent=1 // pred_check_branch
      %199 = sbr.rel (0) target = $region25
    $region24: #{tpu_custom_call.1} parent=1 // pred_region
      %s201 = ssub.s32 64, 64
      %202 = vsyncadd [#allocation4], %s201
      %s204 = sshll.u32 [#allocation7], 4
      %s205 = int_to_ptr.vmem [resolvable:$true] %s204
      %207 = dma.vmem_to_hbm [thread:$0]  %s205, 64, %s3, [#allocation4]
    $region25: #{tpu_custom_call.1} parent=1 // pred_fallthru
      _
    // Predicated region
    $region26: #{tpu_custom_call.1} parent=1 // pred_check
      _
    $region27: #{tpu_custom_call.1} parent=1 // pred_check_branch
      %209 = sbr.rel (0) target = $region29
    $region28: #{tpu_custom_call.1} parent=1 // pred_region
      %210 = dma.done [#allocation4], 64
    $region29: #{tpu_custom_call.1} parent=1 // pred_fallthru
      _
    %211 = vsyncpa [#allocation3], 1
    %212 = vsyncpa [#allocation6], 1
    %213 = vsyncpa [#allocation4], 1

</llo_original>
